<compile_context>
chip_gen: v6e
topology: v6e:2x2x1
jax: 0.10.0
libtpu: 0.0.40
codegen_flags: <defaults>
</compile_context>

<pallas_src>
import jax
import jax.numpy as jnp
from jax.experimental import pallas as pl
from jax.experimental.pallas import tpu as pltpu


def _mean_center_kernel(x_ref, mean_ref, o_ref):
    # x_ref:    (rb, hb, wb) block of the (N*C, H, W) view
    # mean_ref: (rb, 1)      per-row (= per-channel) mean; VPU-broadcast
    o_ref[...] = x_ref[...] - mean_ref[...][:, :, None]


def _round_up(x: int, m: int) -> int:
    return ((x + m - 1) // m) * m


def _block_dim(dim: int, align: int, cap: int) -> int:
    """Legal tiled-dim block size: the full dim if it fits under `cap`,
    otherwise the largest multiple of `align` <= cap (at least `align`)."""
    if dim <= cap:
        return dim
    return max(align, (cap // align) * align)


def _mean_center_impl(img_nchw, mean, *, target_block_bytes: int = 8 << 20):
    """img - mean with img in NCHW and a per-channel mean (broadcast over N,H,W)."""
    N, C, H, W = img_nchw.shape
    rows = N * C
    dtype = img_nchw.dtype
    itemsize = jnp.dtype(dtype).itemsize

    # Per-row mean column: row n*C + c needs mean[c].  Tiny (N*C, 1) array.
    mean_vec = jnp.asarray(mean, dtype).reshape(-1)     # scalar / (C,) / (1,C,1,1) all OK
    mean_vec = jnp.broadcast_to(mean_vec, (C,))
    mean_col = jnp.broadcast_to(mean_vec[None, :], (N, C)).reshape(rows, 1)

    # Layout-preserving view: merge leading dims only (never H,W).
    x3d = img_nchw.reshape(rows, H, W)

    # ---- Block selection: ~target_block_bytes per x/out block; ragged edges OK.
    sub_align = max(8, 32 // itemsize)          # 8 f32 / 16 bf16 / 32 int8|fp8
    lane_align = 128
    target = max(1, target_block_bytes // itemsize)

    w0 = min(W, lane_align)                      # minimum legal extents
    h0 = min(H, sub_align)
    r0 = min(rows, sub_align)

    wb = _block_dim(W, lane_align, max(w0, target // max(1, r0 * h0)))
    hb = _block_dim(H, sub_align,
                    max(h0, target // max(1, r0 * _round_up(wb, lane_align))))
    rb = _block_dim(rows, sub_align,
                    max(r0, target // max(1, _round_up(hb, sub_align) * _round_up(wb, lane_align))))

    # On non-trivial inputs guarantee >= 2 grid steps so the all-parallel grid
    # can be sharded across both v7x TensorCores.
    total_bytes = rows * H * W * itemsize
    n_steps = pl.cdiv(rows, rb) * pl.cdiv(H, hb) * pl.cdiv(W, wb)
    if total_bytes >= (4 << 20) and n_steps < 2:
        if rows > sub_align:
            rb = max(sub_align, (pl.cdiv(rows, 2) // sub_align) * sub_align)
        elif H > sub_align:
            hb = max(sub_align, (pl.cdiv(H, 2) // sub_align) * sub_align)
        elif W > lane_align:
            wb = max(lane_align, (pl.cdiv(W, 2) // lane_align) * lane_align)

    grid = (pl.cdiv(rows, rb), pl.cdiv(H, hb), pl.cdiv(W, wb))

    # VMEM limit from the actual tile-padded blocks: in + out double-buffered
    # plus the tiny mean block, with margin.  (Explicit raise is mandatory on
    # v5e whose default scoped VMEM is only 16 MiB.)
    x_blk_bytes = rb * _round_up(hb, sub_align) * _round_up(wb, lane_align) * itemsize
    m_blk_bytes = _round_up(rb, sub_align) * lane_align * itemsize
    vmem_limit = max(2 * (2 * x_blk_bytes + m_blk_bytes) + (2 << 20), 16 << 20)

    total_elems = rows * H * W
    out3d = pl.pallas_call(
        _mean_center_kernel,
        out_shape=jax.ShapeDtypeStruct((rows, H, W), dtype),
        grid_spec=pltpu.PrefetchScalarGridSpec(
            num_scalar_prefetch=0,
            grid=grid,
            in_specs=[
                pl.BlockSpec((rb, hb, wb), lambda i, j, k: (i, j, k)),
                # Mean block index depends only on the outermost axis i, so it
                # is not re-DMA'd across the inner (j, k) steps.
                pl.BlockSpec((rb, 1), lambda i, j, k: (i, 0)),
            ],
            out_specs=pl.BlockSpec((rb, hb, wb), lambda i, j, k: (i, j, k)),
        ),
        compiler_params=pltpu.CompilerParams(
            dimension_semantics=("parallel", "parallel", "parallel"),
            vmem_limit_bytes=int(vmem_limit),
        ),
        cost_estimate=pl.CostEstimate(
            flops=total_elems,
            transcendentals=0,
            bytes_accessed=(2 * total_elems + rows) * itemsize,
        ),
    )(x3d, mean_col)

    # Layout-preserving view back to NCHW (leading-dim split only).
    return out3d.reshape(N, C, H, W)


@jax.jit
def mean_center(img_nchw, mean):
    return _mean_center_impl(img_nchw, mean)


if __name__ == "__main__":
    key = jax.random.PRNGKey(0)
    k_img, k_mean = jax.random.split(key)

    N, C, H, W = 2, 4, 16, 16
    img = jax.random.normal(k_img, (N, C, H, W), dtype=jnp.float32)
    # Deterministic "mean" parameter (the module's __init__ just stores it).
    mean = jax.random.uniform(k_mean, (C,), dtype=jnp.float32)

    out = mean_center(img, mean)
    jax.block_until_ready(out)

    # Reference: plain-JAX broadcasted per-channel subtraction (NCHW semantics).
    ref = img - mean.reshape(1, C, 1, 1)
    assert out.shape == img.shape and out.dtype == img.dtype
    assert jnp.allclose(out, ref, atol=1e-6), "mismatch vs reference"

    print("KERNEL_OK")
</pallas_src>

<mosaic_0001>
module attributes {stable_mosaic.version = 11 : i64} {
  func.func @_mean_center_kernel(%arg0: i32, %arg1: i32, %arg2: i32, %arg3: memref<8x16x16xf32, #tpu.memory_space<vmem>>, %arg4: memref<8x1xf32, #tpu.memory_space<vmem>>, %arg5: memref<8x16x16xf32, #tpu.memory_space<vmem>>) attributes {dimension_semantics = [#tpu.dimension_semantics<parallel>, #tpu.dimension_semantics<parallel>, #tpu.dimension_semantics<parallel>], iteration_bounds = array<i64: 1, 1, 1>, scalar_prefetch = 0 : i64, scratch_operands = 0 : i64, tpu.core_type = #tpu.core_type<tc>, window_params = [{transform_indices = @transform_0, window_bounds = array<i64: 8, 16, 16>}, {transform_indices = @transform_1, window_bounds = array<i64: 8, 1>}, {transform_indices = @transform_2, window_bounds = array<i64: 8, 16, 16>}]} {
    %c0 = arith.constant 0 : index
    %c0_0 = arith.constant 0 : index
    %c0_1 = arith.constant 0 : index
    %0 = vector.load %arg3[%c0, %c0_0, %c0_1] : memref<8x16x16xf32, #tpu.memory_space<vmem>>, vector<8x16x16xf32>
    %c0_2 = arith.constant 0 : index
    %c0_3 = arith.constant 0 : index
    %1 = vector.load %arg4[%c0_2, %c0_3] : memref<8x1xf32, #tpu.memory_space<vmem>>, vector<8x1xf32>
    %2 = vector.shape_cast %1 : vector<8x1xf32> to vector<8x1x1xf32>
    %3 = vector.broadcast %2 : vector<8x1x1xf32> to vector<8x16x16xf32>
    %4 = arith.subf %0, %3 : vector<8x16x16xf32>
    %c0_4 = arith.constant 0 : index
    %c0_5 = arith.constant 0 : index
    %c0_6 = arith.constant 0 : index
    %5 = vector.load %arg5[%c0_4, %c0_5, %c0_6] : memref<8x16x16xf32, #tpu.memory_space<vmem>>, vector<8x16x16xf32>
    tpu.vector_store %arg5[%c0_4, %c0_5, %c0_6], %4 {strides = array<i32>} : memref<8x16x16xf32, #tpu.memory_space<vmem>>, vector<8x16x16xf32>,
    return
  }
  func.func @transform_0(%arg0: i32, %arg1: i32, %arg2: i32) -> (i32, i32, i32) {
    %c0_i32 = arith.constant 0 : i32
    return %arg0, %arg1, %arg2 : i32, i32, i32
  }
  func.func @transform_1(%arg0: i32, %arg1: i32, %arg2: i32) -> (i32, i32) {
    %c0_i32 = arith.constant 0 : i32
    %c0_i32_0 = arith.constant 0 : i32
    return %arg0, %c0_i32 : i32, i32
  }
  func.func @transform_2(%arg0: i32, %arg1: i32, %arg2: i32) -> (i32, i32, i32) {
    %c0_i32 = arith.constant 0 : i32
    return %arg0, %arg1, %arg2 : i32, i32, i32
  }
}

</mosaic_0001>

<llo_original>
// kernel: mean_center.1
$region0: #{mean_center.1}
  #allocation0 [shape = 'u32[]', space=smem, size = 0x4, offset = 0x4, fixed_abs, tag = 'smem constant byte address 0x4 - core index']
  #allocation1 [shape = 'u32[144,128]{1,0:T(1,128)}', space=vmem, size = 0x12000, scoped, tag = 'internal scratch']
  %s0 = inlined_call_operand.hbm [shape: f32[8,16,16], index: 0, kind: input, shape index: {}]
  %s1 = inlined_call_operand.vmem [shape: f32[8,1], index: 1, kind: input, shape index: {}]
  %s2 = inlined_call_operand.hbm [shape: f32[8,16,16], index: 2, kind: output, shape index: {}]
  %s3 = sld [smem:[#allocation0]]
  $region22: #{mean_center.1} parent=0
    _
  %s5 = ssub.s32 1, %s3
  %s6 = scalar_select 0, %s5, %s3
  $region1: #{mean_center.1} parent=0
    #allocation2 [shape = 'u8[65536]{0}', space=vmem, size = 0x10000, scoped, tag = 'input window, operand 0, single buffered']
    #allocation3 [shape = 's32[1]{0}', space=sflag, size = 0x4, scoped, tag = 'scoped memory for mean_center.1']
    #allocation4 [shape = 's32[1]{0}', space=sflag, size = 0x4, scoped, tag = 'scoped memory for mean_center.1']
    #allocation5 [shape = 'u8[65536]{0}', space=vmem, size = 0x10000, scoped, tag = 'output window, operand 0, single buffered']
    %7 = vsyncpa [#allocation3], 0
    %8 = vsyncpa [#allocation4], 0
    // Predicated region
    $region2: #{mean_center.1} parent=1 // pred_check
      _
    $region3: #{mean_center.1} parent=1 // pred_check_branch
      %10 = sbr.rel (0) target = $region5
    $region4: #{mean_center.1} parent=1 // pred_region
      %s12 = ssub.s32 2048, 2048
      %13 = vsyncadd [#allocation3], %s12
      %s14 = sshll.u32 [#allocation2], 4
      %s15 = int_to_ptr.vmem [resolvable:$true] %s14
      %20 = dma.hbm_to_vmem [thread:$0]  %s0, 2048, %s15, [#allocation3], 128, 128, 8
    $region5: #{mean_center.1} parent=1 // pred_fallthru
      _
    // Predicated region
    $region6: #{mean_center.1} parent=1 // pred_check
      _
    $region7: #{mean_center.1} parent=1 // pred_check_branch
      %22 = sbr.rel (0) target = $region9
    $region8: #{mean_center.1} parent=1 // pred_region
      _
    $region9: #{mean_center.1} parent=1 // pred_fallthru
      _
    // Predicated region
    $region10: #{mean_center.1} parent=1 // pred_check
      _
    $region11: #{mean_center.1} parent=1 // pred_check_branch
      %24 = sbr.rel (0) target = $region13
    $region12: #{mean_center.1} parent=1 // pred_region
      %25 = dma.done [#allocation3], 2048
    $region13: #{mean_center.1} parent=1 // pred_fallthru
      _
    %v26 = vld [vmem:[#allocation2] sm:$0xff]
    %v27 = vld [vmem:[#allocation2 + $0x8] sm:$0xff]
    %v28 = vld [vmem:[#allocation2 + $0x10] sm:$0xff]
    %v29 = vld [vmem:[#allocation2 + $0x18] sm:$0xff]
    %v30 = vld [vmem:[#allocation2 + $0x20] sm:$0xff]
    %v31 = vld [vmem:[#allocation2 + $0x28] sm:$0xff]
    %v32 = vld [vmem:[#allocation2 + $0x30] sm:$0xff]
    %v33 = vld [vmem:[#allocation2 + $0x38] sm:$0xff]
    %v34 = vld [vmem:[#allocation2 + $0x40] sm:$0xff]
    %v35 = vld [vmem:[#allocation2 + $0x48] sm:$0xff]
    %v36 = vld [vmem:[#allocation2 + $0x50] sm:$0xff]
    %v37 = vld [vmem:[#allocation2 + $0x58] sm:$0xff]
    %v38 = vld [vmem:[#allocation2 + $0x60] sm:$0xff]
    %v39 = vld [vmem:[#allocation2 + $0x68] sm:$0xff]
    %v40 = vld [vmem:[#allocation2 + $0x70] sm:$0xff]
    %v41 = vld [vmem:[#allocation2 + $0x78] sm:$0xff]
    %v42 = vld [vmem:[%s1] sm:$0xff]
    %v44 = vcombine.high %v42, %v42
    %v46 = vunpack.c.l.s4 1966171168
    %v47 = vunpack.c.0.s8 %v46
    %v48 = vlaneseq
    %v49 = vshrl.u32 %v48, 7
    %v50 = vsub.s32 %v47, %v49
    %v51 = vrot.slane %v42, %v50
    %v53 = vunpack.c.l.s4 1966171168
    %v54 = vunpack.c.0.s8 %v53
    %v55 = vlaneseq
    %v56 = vshrl.u32 %v55, 7
    %v57 = vsub.s32 %v54, %v56
    %v58 = vrot.slane %v44, %v57
    %v59 = vcombine.high %v51, %v51
    %v60 = vcombine.high %v58, %v58
    %v62 = vunpack.c.l.s4 1966171168
    %v63 = vunpack.c.0.s8 %v62
    %v64 = vlaneseq
    %v65 = vshrl.u32 %v64, 7
    %v66 = vsub.s32 %v63, %v65
    %v67 = vrot.slane %v51, %v66
    %v69 = vunpack.c.l.s4 1966171168
    %v70 = vunpack.c.0.s8 %v69
    %v71 = vlaneseq
    %v72 = vshrl.u32 %v71, 7
    %v73 = vsub.s32 %v70, %v72
    %v74 = vrot.slane %v58, %v73
    %v76 = vunpack.c.l.s4 1966171168
    %v77 = vunpack.c.0.s8 %v76
    %v78 = vlaneseq
    %v79 = vshrl.u32 %v78, 7
    %v80 = vsub.s32 %v77, %v79
    %v81 = vrot.slane %v59, %v80
    %v83 = vunpack.c.l.s4 1966171168
    %v84 = vunpack.c.0.s8 %v83
    %v85 = vlaneseq
    %v86 = vshrl.u32 %v85, 7
    %v87 = vsub.s32 %v84, %v86
    %v88 = vrot.slane %v60, %v87
    %v89 = vcombine.high %v67, %v67
    %v90 = vcombine.high %v74, %v74
    %v91 = vcombine.high %v81, %v81
    %v92 = vcombine.high %v88, %v88
    %v93 = vlaneseq
    %v94 = vshrl.u32 %v93, 7
    %v95 = vsub.s32 0, %v94
    %v96 = vrot.slane %v67, %v95
    %v97 = vlaneseq
    %v98 = vshrl.u32 %v97, 7
    %v99 = vsub.s32 0, %v98
    %v100 = vrot.slane %v81, %v99
    %v101 = vlaneseq
    %v102 = vshrl.u32 %v101, 7
    %v103 = vsub.s32 0, %v102
    %v104 = vrot.slane %v89, %v103
    %v105 = vlaneseq
    %v106 = vshrl.u32 %v105, 7
    %v107 = vsub.s32 0, %v106
    %v108 = vrot.slane %v91, %v107
    %v109 = vlaneseq
    %v110 = vshrl.u32 %v109, 7
    %v111 = vsub.s32 0, %v110
    %v112 = vrot.slane %v74, %v111
    %v113 = vlaneseq
    %v114 = vshrl.u32 %v113, 7
    %v115 = vsub.s32 0, %v114
    %v116 = vrot.slane %v88, %v115
    %v117 = vlaneseq
    %v118 = vshrl.u32 %v117, 7
    %v119 = vsub.s32 0, %v118
    %v120 = vrot.slane %v90, %v119
    %v121 = vlaneseq
    %v122 = vshrl.u32 %v121, 7
    %v123 = vsub.s32 0, %v122
    %v124 = vrot.slane %v92, %v123
    %125 = vset.pattern.permute.xlu0 0
    %126 = vperm.xlu0 %125, %v96
    %v127 = vpop.permute.xlu0 %126
    %129 = vset.pattern.permute.xlu0 0
    %130 = vperm.xlu0 %129, %v100
    %v131 = vpop.permute.xlu0 %130
    %133 = vset.pattern.permute.xlu0 0
    %134 = vperm.xlu0 %133, %v104
    %v135 = vpop.permute.xlu0 %134
    %137 = vset.pattern.permute.xlu0 0
    %138 = vperm.xlu0 %137, %v108
    %v139 = vpop.permute.xlu0 %138
    %141 = vset.pattern.permute.xlu0 0
    %142 = vperm.xlu0 %141, %v112
    %v143 = vpop.permute.xlu0 %142
    %145 = vset.pattern.permute.xlu0 0
    %146 = vperm.xlu0 %145, %v116
    %v147 = vpop.permute.xlu0 %146
    %149 = vset.pattern.permute.xlu0 0
    %150 = vperm.xlu0 %149, %v120
    %v151 = vpop.permute.xlu0 %150
    %153 = vset.pattern.permute.xlu0 0
    %154 = vperm.xlu0 %153, %v124
    %v155 = vpop.permute.xlu0 %154
    %v157 = vsub.f32 %v26, %v127
    %v158 = vsub.f32 %v27, %v127
    %v159 = vsub.f32 %v28, %v131
    %v160 = vsub.f32 %v29, %v131
    %v161 = vsub.f32 %v30, %v135
    %v162 = vsub.f32 %v31, %v135
    %v163 = vsub.f32 %v32, %v139
    %v164 = vsub.f32 %v33, %v139
    %v165 = vsub.f32 %v34, %v143
    %v166 = vsub.f32 %v35, %v143
    %v167 = vsub.f32 %v36, %v147
    %v168 = vsub.f32 %v37, %v147
    %v169 = vsub.f32 %v38, %v151
    %v170 = vsub.f32 %v39, %v151
    %v171 = vsub.f32 %v40, %v155
    %v172 = vsub.f32 %v41, %v155
    %vm173 = vcmask 130048
    %174 = vst.msk [vmem:[#allocation5] sm:$0xff] %vm173, %v157
    %175 = vst.msk [vmem:[#allocation5 + $0x8] sm:$0xff] %vm173, %v158
    %176 = vst.msk [vmem:[#allocation5 + $0x10] sm:$0xff] %vm173, %v159
    %177 = vst.msk [vmem:[#allocation5 + $0x18] sm:$0xff] %vm173, %v160
    %178 = vst.msk [vmem:[#allocation5 + $0x20] sm:$0xff] %vm173, %v161
    %179 = vst.msk [vmem:[#allocation5 + $0x28] sm:$0xff] %vm173, %v162
    %180 = vst.msk [vmem:[#allocation5 + $0x30] sm:$0xff] %vm173, %v163
    %181 = vst.msk [vmem:[#allocation5 + $0x38] sm:$0xff] %vm173, %v164
    %182 = vst.msk [vmem:[#allocation5 + $0x40] sm:$0xff] %vm173, %v165
    %183 = vst.msk [vmem:[#allocation5 + $0x48] sm:$0xff] %vm173, %v166
    %184 = vst.msk [vmem:[#allocation5 + $0x50] sm:$0xff] %vm173, %v167
    %185 = vst.msk [vmem:[#allocation5 + $0x58] sm:$0xff] %vm173, %v168
    %186 = vst.msk [vmem:[#allocation5 + $0x60] sm:$0xff] %vm173, %v169
    %187 = vst.msk [vmem:[#allocation5 + $0x68] sm:$0xff] %vm173, %v170
    %188 = vst.msk [vmem:[#allocation5 + $0x70] sm:$0xff] %vm173, %v171
    %189 = vst.msk [vmem:[#allocation5 + $0x78] sm:$0xff] %vm173, %v172
    // Predicated region
    $region14: #{mean_center.1} parent=1 // pred_check
      _
    $region15: #{mean_center.1} parent=1 // pred_check_branch
      %191 = sbr.rel (0) target = $region17
    $region16: #{mean_center.1} parent=1 // pred_region
      %s193 = ssub.s32 2048, 2048
      %194 = vsyncadd [#allocation4], %s193
      %s195 = sshll.u32 [#allocation5], 4
      %s196 = int_to_ptr.vmem [resolvable:$true] %s195
      %201 = dma.vmem_to_hbm [thread:$0]  %s196, 2048, %s2, [#allocation4], 128, 128, 8
    $region17: #{mean_center.1} parent=1 // pred_fallthru
      _
    // Predicated region
    $region18: #{mean_center.1} parent=1 // pred_check
      _
    $region19: #{mean_center.1} parent=1 // pred_check_branch
      %203 = sbr.rel (0) target = $region21
    $region20: #{mean_center.1} parent=1 // pred_region
      %204 = dma.done [#allocation4], 2048
    $region21: #{mean_center.1} parent=1 // pred_fallthru
      _
    %205 = vsyncpa [#allocation3], 1
    %206 = vsyncpa [#allocation4], 1

</llo_original>
